<compile_context>
chip_gen: v7x
topology: tpu7x:2x2x1
jax: 0.10.0
libtpu: 0.0.40
codegen_flags: <defaults>
</compile_context>

<pallas_src>
import functools

import numpy as np
import jax
import jax.numpy as jnp
from jax import lax
from jax.experimental import pallas as pl
from jax.experimental.pallas import tpu as pltpu

HIDDEN = 100          # nn.Linear(1, 100)
LEAKY_SLOPE = 0.01    # nn.LeakyReLU default negative_slope
BLOCK = 256           # output tile per grid step (amortizes step overhead)
SUB = 16              # row-strip height inside a tile (keeps vreg pressure low)
UNROLL = 4            # manual unroll of the hidden loop; HIDDEN % UNROLL == 0


# ----------------------------------------------------------------------------
# Fused kernel: minimum-image pair distances + folded elementwise MLP energy
#   E(d) = B + A*d + sum_h c_h * |d + s_h|
# ----------------------------------------------------------------------------
def _fused_pair_energy_kernel(ib_ref, jb_ref,            # scalar-prefetch (unused in body)
                              cell_ref, icell_ref,       # SMEM (3,), (3,)
                              s_ref, c_ref, ab_ref,      # SMEM (H,), (H,), (2,)
                              xi_ref, xj_ref,            # VMEM (block,3), (3,block)
                              o_ref,                     # VMEM (block,block)
                              *, block, sub):
    del ib_ref, jb_ref
    a_lin = ab_ref[0]
    b_const = ab_ref[1]

    @pl.loop(0, block // sub)
    def _strip(r):
        r0 = pl.multiple_of(r * sub, sub)
        xs = xi_ref[pl.ds(r0, sub), :]                   # (sub, 3)

        # Minimum-image squared distance, per coordinate, on lane-dense planes.
        d2 = jnp.zeros((sub, block), jnp.float32)
        for k in range(3):
            diff = xs[:, k:k + 1] - xj_ref[k:k + 1, :]   # (sub, block)
            diff = diff - cell_ref[k] * jnp.floor(diff * icell_ref[k] + 0.5)
            d2 = d2 + diff * diff
        # Guarded sqrt: avoids NaN gradients at d == 0 if differentiated for
        # forces (this file is force.py); identical values in the forward pass.
        d = jnp.where(d2 > 0.0, jnp.sqrt(d2), 0.0)

        # Folded MLP: acc = B + A*d + sum_h c_h * |d + s_h|   (pure VPU work)
        def hid(t, acc):
            h0 = t * UNROLL
            for u in range(UNROLL):                      # static manual unroll
                h = h0 + u
                acc = acc + c_ref[h] * jnp.abs(d + s_ref[h])
            return acc

        acc0 = a_lin * d + b_const
        acc = lax.fori_loop(0, HIDDEN // UNROLL, hid, acc0)
        o_ref[pl.ds(r0, sub), :] = acc


# ----------------------------------------------------------------------------
# Wrapper-side parameter folding (exact rewrite of fc2(leaky(fc1(d))))
# ----------------------------------------------------------------------------
def fold_mlp_params(w1, b1, w2, b2, slope=LEAKY_SLOPE):
    w1 = w1.reshape(-1).astype(jnp.float32)
    b1 = b1.reshape(-1).astype(jnp.float32)
    w2 = w2.reshape(-1).astype(jnp.float32)
    b2 = b2.reshape(-1).astype(jnp.float32)
    nz = w1 != 0.0
    safe_w1 = jnp.where(nz, w1, 1.0)
    s_h = jnp.where(nz, b1 / safe_w1, 0.0)                       # shift per hidden
    c_h = jnp.where(nz, 0.5 * (1.0 - slope) * w2 * jnp.abs(w1), 0.0)
    a_lin = 0.5 * (1.0 + slope) * jnp.sum(jnp.where(nz, w2 * w1, 0.0))
    leaky_b1 = jnp.where(b1 >= 0.0, b1, slope * b1)
    b_const = (b2.reshape(())
               + 0.5 * (1.0 + slope) * jnp.sum(jnp.where(nz, w2 * b1, 0.0))
               + jnp.sum(jnp.where(nz, 0.0, w2 * leaky_b1)))     # w1==0 terms
    return s_h, c_h, a_lin, b_const


# ----------------------------------------------------------------------------
# Tiled, triangle-only pairwise-energy kernel launch
# ----------------------------------------------------------------------------
def pair_energy_matrix(x, cell, w1, b1, w2, b2, block=BLOCK, sub=SUB):
    """(n, n) matrix of E(d_ij), valid on the strict upper triangle i < j."""
    n = x.shape[0]
    block = 128 if n <= 128 else block               # don't over-pad tiny inputs
    n_pad = ((n + block - 1) // block) * block
    nb = n_pad // block

    x_pad = jnp.zeros((n_pad, 3), jnp.float32).at[:n].set(x.astype(jnp.float32))
    x_t = x_pad.T                                    # (3, n_pad): lane-dense cols
    cell = jnp.asarray(cell, jnp.float32).reshape(3)
    icell = 1.0 / cell                               # no per-element divides in-kernel

    # Upper-triangle (bi <= bj) tile pairs only: no dead grid steps.
    bi, bj = np.triu_indices(nb)
    num_tiles = int(bi.size)
    ib_tbl = jnp.asarray(bi, jnp.int32)
    jb_tbl = jnp.asarray(bj, jnp.int32)

    s_h, c_h, a_lin, b_const = fold_mlp_params(w1, b1, w2, b2)
    ab = jnp.stack([a_lin, b_const]).astype(jnp.float32)

    smem = pl.BlockSpec(memory_space=pltpu.MemorySpace.SMEM)
    kernel = functools.partial(_fused_pair_energy_kernel, block=block, sub=sub)

    grid_spec = pltpu.PrefetchScalarGridSpec(
        num_scalar_prefetch=2,
        grid=(num_tiles,),
        in_specs=[
            smem,                                                   # cell   (3,)
            smem,                                                   # 1/cell (3,)
            smem,                                                   # s_h    (H,)
            smem,                                                   # c_h    (H,)
            smem,                                                   # [A, B] (2,)
            pl.BlockSpec((block, 3), lambda t, ib, jb: (ib[t], 0)),  # row atoms
            pl.BlockSpec((3, block), lambda t, ib, jb: (0, jb[t])),  # col atoms
        ],
        out_specs=pl.BlockSpec((block, block), lambda t, ib, jb: (ib[t], jb[t])),
    )

    e = pl.pallas_call(
        kernel,
        out_shape=jax.ShapeDtypeStruct((n_pad, n_pad), jnp.float32),
        grid_spec=grid_spec,
        compiler_params=pltpu.CompilerParams(
            # Uniform-cost triangle tiles -> a contiguous 2-way split is
            # balanced across v7x's two TensorCores; no-op on v5e/v6e.
            dimension_semantics=("parallel",),
        ),
    )(ib_tbl, jb_tbl, cell, icell, s_h, c_h, ab, x_pad, x_t)
    return e[:n, :n]


# ----------------------------------------------------------------------------
# Parameter setup (deterministic, PyTorch-default-style uniform init)
# ----------------------------------------------------------------------------
def init_params(key):
    k1, k2, k3, k4 = jax.random.split(key, 4)
    # fc1: in_features=1  -> bound = 1/sqrt(1) = 1
    w1 = jax.random.uniform(k1, (HIDDEN,), jnp.float32, -1.0, 1.0)
    b1 = jax.random.uniform(k2, (HIDDEN,), jnp.float32, -1.0, 1.0)
    # fc2: in_features=100 -> bound = 1/sqrt(100) = 0.1
    w2 = jax.random.uniform(k3, (HIDDEN,), jnp.float32, -0.1, 0.1)
    b2 = jax.random.uniform(k4, (1,), jnp.float32, -0.1, 0.1)
    return w1, b1, w2, b2


# ----------------------------------------------------------------------------
# Full forward
# ----------------------------------------------------------------------------
@jax.jit
def nnp_forward(x, cell, w1, b1, w2, b2):
    n = x.shape[0]
    e = pair_energy_matrix(x, cell, w1, b1, w2, b2)        # Pallas, triangle tiles only
    # generate_nbr_list pair selection (all i<j pairs, no cutoff).
    # TODO(synk): pack the strict-upper-triangle values to a (P,1) output
    #             in-kernel (per-tile offset table) to drop this O(N^2) XLA
    #             gather; left as plain-JAX glue since the packed layout of
    #             diagonal tiles is non-rectangular.
    ii, jj = jnp.triu_indices(n, k=1)
    return e[ii, jj].reshape(-1, 1)                        # (P, 1), like fc2 output


# Pure-JAX reference for sanity checking
def reference_forward(x, cell, w1, b1, w2, b2):
    diff = x[:, None, :] - x[None, :, :]
    c = cell.reshape(1, 1, 3)
    diff = diff - c * jnp.floor(diff / c + 0.5)
    dist = jnp.sqrt(jnp.sum(diff * diff, axis=-1))
    ii, jj = jnp.triu_indices(x.shape[0], k=1)
    d = dist[ii, jj][:, None]                              # (P, 1)
    h = d * w1[None, :] + b1[None, :]                      # (P, 100)
    h = jnp.where(h >= 0.0, h, LEAKY_SLOPE * h)
    return jnp.sum(h * w2[None, :], axis=-1, keepdims=True) + b2.reshape(1, 1)


if __name__ == "__main__":
    key = jax.random.PRNGKey(0)
    kx, kp = jax.random.split(key)

    N = 16
    cell = jnp.array([10.0, 10.0, 10.0], jnp.float32)
    x = jax.random.uniform(kx, (N, 3), jnp.float32, minval=0.0, maxval=10.0)

    w1, b1, w2, b2 = init_params(kp)

    out = nnp_forward(x, cell, w1, b1, w2, b2)
    out = jax.block_until_ready(out)

    ref = reference_forward(x, cell, w1, b1, w2, b2)
    assert out.shape == (N * (N - 1) // 2, 1), out.shape
    assert jnp.allclose(out, ref, atol=1e-4, rtol=1e-4), (
        float(jnp.max(jnp.abs(out - ref)))
    )
    print("KERNEL_OK")
</pallas_src>

<mosaic_0001>
module attributes {stable_mosaic.version = 11 : i64} {
  func.func private @main(%arg0: i32) attributes {dimension_semantics = [#tpu.dimension_semantics<core_parallel>], iteration_bounds = array<i64: 2>, tpu.core_type = #tpu.core_type<sc_scalar_subcore>, window_params = []} {
    return
  }
}

module attributes {stable_mosaic.version = 11 : i64} {
  func.func private @main(%arg0: i32) attributes {dimension_semantics = [#tpu.dimension_semantics<core_parallel>], iteration_bounds = array<i64: 2>, tpu.core_type = #tpu.core_type<sc_scalar_subcore>, window_params = []} {
    return
  }
}

module attributes {stable_mosaic.version = 11 : i64} {
  func.func @_fused_pair_energy_kernel(%arg0: i32, %arg1: memref<1xi32, #tpu.memory_space<smem>>, %arg2: memref<1xi32, #tpu.memory_space<smem>>, %arg3: memref<3xf32, #tpu.memory_space<smem>>, %arg4: memref<3xf32, #tpu.memory_space<smem>>, %arg5: memref<100xf32, #tpu.memory_space<smem>>, %arg6: memref<100xf32, #tpu.memory_space<smem>>, %arg7: memref<2xf32, #tpu.memory_space<smem>>, %arg8: memref<128x3xf32, #tpu.memory_space<vmem>>, %arg9: memref<3x128xf32, #tpu.memory_space<vmem>>, %arg10: memref<128x128xf32, #tpu.memory_space<vmem>>) attributes {dimension_semantics = [#tpu.dimension_semantics<parallel>], iteration_bounds = array<i64: 1>, scalar_prefetch = 2 : i64, scratch_operands = 0 : i64, tpu.core_type = #tpu.core_type<tc>, window_params = [{transform_indices = @transform_0, window_bounds = array<i64: 3>}, {transform_indices = @transform_1, window_bounds = array<i64: 3>}, {transform_indices = @transform_2, window_bounds = array<i64: 100>}, {transform_indices = @transform_3, window_bounds = array<i64: 100>}, {transform_indices = @transform_4, window_bounds = array<i64: 2>}, {transform_indices = @transform_5, window_bounds = array<i64: 128, 3>}, {transform_indices = @transform_6, window_bounds = array<i64: 3, 128>}, {transform_indices = @transform_7, window_bounds = array<i64: 128, 128>}]} {
    %c0 = arith.constant 0 : index
    %0 = memref.load %arg7[%c0] : memref<2xf32, #tpu.memory_space<smem>>
    %c1 = arith.constant 1 : index
    %1 = memref.load %arg7[%c1] : memref<2xf32, #tpu.memory_space<smem>>
    %c0_i32 = arith.constant 0 : i32
    %c8_i32 = arith.constant 8 : i32
    %2 = arith.addi %c0_i32, %c8_i32 : i32
    %c1_i32 = arith.constant 1 : i32
    scf.for %arg11 = %c0_i32 to %2 step %c1_i32  : i32 {
      %c1_i32_1 = arith.constant 1 : i32
      %3 = arith.muli %arg11, %c1_i32_1 : i32
      %c0_i32_2 = arith.constant 0 : i32
      %4 = arith.addi %c0_i32_2, %3 : i32
      %c16_i32 = arith.constant 16 : i32
      %5 = arith.muli %4, %c16_i32 : i32
      %6 = tpu.assume_multiple %5, 16 : i32
      %7 = arith.index_cast %6 : i32 to index
      %c0_3 = arith.constant 0 : index
      %8 = vector.load %arg8[%7, %c0_3] : memref<128x3xf32, #tpu.memory_space<vmem>>, vector<16x3xf32>
      %cst = arith.constant 0.000000e+00 : f32
      %9 = vector.broadcast %cst : f32 to vector<16x128xf32>
      %10 = vector.extract_strided_slice %8 {offsets = [0, 0], sizes = [16, 1], strides = [1, 1]} : vector<16x3xf32> to vector<16x1xf32>
      %c0_4 = arith.constant 0 : index
      %c0_5 = arith.constant 0 : index
      %11 = vector.load %arg9[%c0_4, %c0_5] : memref<3x128xf32, #tpu.memory_space<vmem>>, vector<1x128xf32>
      %12 = vector.broadcast %10 : vector<16x1xf32> to vector<16x128xf32>
      %13 = vector.broadcast %11 : vector<1x128xf32> to vector<16x128xf32>
      %14 = arith.subf %12, %13 : vector<16x128xf32>
      %c0_6 = arith.constant 0 : index
      %15 = memref.load %arg3[%c0_6] : memref<3xf32, #tpu.memory_space<smem>>
      %c0_7 = arith.constant 0 : index
      %16 = memref.load %arg4[%c0_7] : memref<3xf32, #tpu.memory_space<smem>>
      %17 = vector.broadcast %16 : f32 to vector<16x128xf32>
      %18 = arith.mulf %14, %17 : vector<16x128xf32>
      %cst_8 = arith.constant 5.000000e-01 : f32
      %19 = vector.broadcast %cst_8 : f32 to vector<16x128xf32>
      %20 = arith.addf %18, %19 : vector<16x128xf32>
      %21 = math.floor %20 : vector<16x128xf32>
      %22 = vector.broadcast %15 : f32 to vector<16x128xf32>
      %23 = arith.mulf %22, %21 : vector<16x128xf32>
      %24 = arith.subf %14, %23 : vector<16x128xf32>
      %25 = arith.mulf %24, %24 : vector<16x128xf32>
      %26 = arith.addf %9, %25 : vector<16x128xf32>
      %27 = vector.extract_strided_slice %8 {offsets = [0, 1], sizes = [16, 1], strides = [1, 1]} : vector<16x3xf32> to vector<16x1xf32>
      %c1_9 = arith.constant 1 : index
      %c0_10 = arith.constant 0 : index
      %28 = vector.load %arg9[%c1_9, %c0_10] : memref<3x128xf32, #tpu.memory_space<vmem>>, vector<1x128xf32>
      %29 = vector.broadcast %27 : vector<16x1xf32> to vector<16x128xf32>
      %30 = vector.broadcast %28 : vector<1x128xf32> to vector<16x128xf32>
      %31 = arith.subf %29, %30 : vector<16x128xf32>
      %c1_11 = arith.constant 1 : index
      %32 = memref.load %arg3[%c1_11] : memref<3xf32, #tpu.memory_space<smem>>
      %c1_12 = arith.constant 1 : index
      %33 = memref.load %arg4[%c1_12] : memref<3xf32, #tpu.memory_space<smem>>
      %34 = vector.broadcast %33 : f32 to vector<16x128xf32>
      %35 = arith.mulf %31, %34 : vector<16x128xf32>
      %cst_13 = arith.constant 5.000000e-01 : f32
      %36 = vector.broadcast %cst_13 : f32 to vector<16x128xf32>
      %37 = arith.addf %35, %36 : vector<16x128xf32>
      %38 = math.floor %37 : vector<16x128xf32>
      %39 = vector.broadcast %32 : f32 to vector<16x128xf32>
      %40 = arith.mulf %39, %38 : vector<16x128xf32>
      %41 = arith.subf %31, %40 : vector<16x128xf32>
      %42 = arith.mulf %41, %41 : vector<16x128xf32>
      %43 = arith.addf %26, %42 : vector<16x128xf32>
      %44 = vector.extract_strided_slice %8 {offsets = [0, 2], sizes = [16, 1], strides = [1, 1]} : vector<16x3xf32> to vector<16x1xf32>
      %c2 = arith.constant 2 : index
      %c0_14 = arith.constant 0 : index
      %45 = vector.load %arg9[%c2, %c0_14] : memref<3x128xf32, #tpu.memory_space<vmem>>, vector<1x128xf32>
      %46 = vector.broadcast %44 : vector<16x1xf32> to vector<16x128xf32>
      %47 = vector.broadcast %45 : vector<1x128xf32> to vector<16x128xf32>
      %48 = arith.subf %46, %47 : vector<16x128xf32>
      %c2_15 = arith.constant 2 : index
      %49 = memref.load %arg3[%c2_15] : memref<3xf32, #tpu.memory_space<smem>>
      %c2_16 = arith.constant 2 : index
      %50 = memref.load %arg4[%c2_16] : memref<3xf32, #tpu.memory_space<smem>>
      %51 = vector.broadcast %50 : f32 to vector<16x128xf32>
      %52 = arith.mulf %48, %51 : vector<16x128xf32>
      %cst_17 = arith.constant 5.000000e-01 : f32
      %53 = vector.broadcast %cst_17 : f32 to vector<16x128xf32>
      %54 = arith.addf %52, %53 : vector<16x128xf32>
      %55 = math.floor %54 : vector<16x128xf32>
      %56 = vector.broadcast %49 : f32 to vector<16x128xf32>
      %57 = arith.mulf %56, %55 : vector<16x128xf32>
      %58 = arith.subf %48, %57 : vector<16x128xf32>
      %59 = arith.mulf %58, %58 : vector<16x128xf32>
      %60 = arith.addf %43, %59 : vector<16x128xf32>
      %cst_18 = arith.constant 0.000000e+00 : f32
      %61 = vector.broadcast %cst_18 : f32 to vector<16x128xf32>
      %62 = arith.cmpf ogt, %60, %61 : vector<16x128xf32>
      %63 = math.sqrt %60 : vector<16x128xf32>
      %cst_19 = arith.constant 0.000000e+00 : f32
      %64 = vector.broadcast %cst_19 : f32 to vector<16x128xf32>
      %65 = arith.select %62, %63, %64 : vector<16x128xi1>, vector<16x128xf32>
      %66 = vector.broadcast %0 : f32 to vector<16x128xf32>
      %67 = arith.mulf %66, %65 : vector<16x128xf32>
      %68 = vector.broadcast %1 : f32 to vector<16x128xf32>
      %69 = arith.addf %67, %68 : vector<16x128xf32>
      %c0_i32_20 = arith.constant 0 : i32
      %c25_i32 = arith.constant 25 : i32
      %70 = arith.addi %c0_i32_20, %c25_i32 : i32
      %c1_i32_21 = arith.constant 1 : i32
      %71 = scf.for %arg12 = %c0_i32_20 to %70 step %c1_i32_21 iter_args(%arg13 = %69) -> (vector<16x128xf32>)  : i32 {
        %c4_i32 = arith.constant 4 : i32
        %74 = arith.muli %arg12, %c4_i32 : i32
        %c0_i32_24 = arith.constant 0 : i32
        %75 = arith.addi %74, %c0_i32_24 : i32
        %76 = arith.index_cast %75 : i32 to index
        %77 = memref.load %arg6[%76] : memref<100xf32, #tpu.memory_space<smem>>
        %78 = arith.index_cast %75 : i32 to index
        %79 = memref.load %arg5[%78] : memref<100xf32, #tpu.memory_space<smem>>
        %80 = vector.broadcast %79 : f32 to vector<16x128xf32>
        %81 = arith.addf %65, %80 : vector<16x128xf32>
        %82 = math.absf %81 : vector<16x128xf32>
        %83 = vector.broadcast %77 : f32 to vector<16x128xf32>
        %84 = arith.mulf %83, %82 : vector<16x128xf32>
        %85 = arith.addf %arg13, %84 : vector<16x128xf32>
        %c1_i32_25 = arith.constant 1 : i32
        %86 = arith.addi %74, %c1_i32_25 : i32
        %87 = arith.index_cast %86 : i32 to index
        %88 = memref.load %arg6[%87] : memref<100xf32, #tpu.memory_space<smem>>
        %89 = arith.index_cast %86 : i32 to index
        %90 = memref.load %arg5[%89] : memref<100xf32, #tpu.memory_space<smem>>
        %91 = vector.broadcast %90 : f32 to vector<16x128xf32>
        %92 = arith.addf %65, %91 : vector<16x128xf32>
        %93 = math.absf %92 : vector<16x128xf32>
        %94 = vector.broadcast %88 : f32 to vector<16x128xf32>
        %95 = arith.mulf %94, %93 : vector<16x128xf32>
        %96 = arith.addf %85, %95 : vector<16x128xf32>
        %c2_i32 = arith.constant 2 : i32
        %97 = arith.addi %74, %c2_i32 : i32
        %98 = arith.index_cast %97 : i32 to index
        %99 = memref.load %arg6[%98] : memref<100xf32, #tpu.memory_space<smem>>
        %100 = arith.index_cast %97 : i32 to index
        %101 = memref.load %arg5[%100] : memref<100xf32, #tpu.memory_space<smem>>
        %102 = vector.broadcast %101 : f32 to vector<16x128xf32>
        %103 = arith.addf %65, %102 : vector<16x128xf32>
        %104 = math.absf %103 : vector<16x128xf32>
        %105 = vector.broadcast %99 : f32 to vector<16x128xf32>
        %106 = arith.mulf %105, %104 : vector<16x128xf32>
        %107 = arith.addf %96, %106 : vector<16x128xf32>
        %c3_i32 = arith.constant 3 : i32
        %108 = arith.addi %74, %c3_i32 : i32
        %109 = arith.index_cast %108 : i32 to index
        %110 = memref.load %arg6[%109] : memref<100xf32, #tpu.memory_space<smem>>
        %111 = arith.index_cast %108 : i32 to index
        %112 = memref.load %arg5[%111] : memref<100xf32, #tpu.memory_space<smem>>
        %113 = vector.broadcast %112 : f32 to vector<16x128xf32>
        %114 = arith.addf %65, %113 : vector<16x128xf32>
        %115 = math.absf %114 : vector<16x128xf32>
        %116 = vector.broadcast %110 : f32 to vector<16x128xf32>
        %117 = arith.mulf %116, %115 : vector<16x128xf32>
        %118 = arith.addf %107, %117 : vector<16x128xf32>
        scf.yield %118 : vector<16x128xf32>
      }
      %c25_i32_22 = arith.constant 25 : i32
      %72 = arith.index_cast %6 : i32 to index
      %c0_23 = arith.constant 0 : index
      %73 = vector.load %arg10[%72, %c0_23] : memref<128x128xf32, #tpu.memory_space<vmem>>, vector<16x128xf32>
      tpu.vector_store %arg10[%72, %c0_23], %71 {strides = array<i32>} : memref<128x128xf32, #tpu.memory_space<vmem>>, vector<16x128xf32>,
    }
    %c8_i32_0 = arith.constant 8 : i32
    return
  }
  func.func @transform_0(%arg0: i32, %arg1: memref<1xi32, #tpu.memory_space<smem>>, %arg2: memref<1xi32, #tpu.memory_space<smem>>) -> i32 {
    %c0_i32 = arith.constant 0 : i32
    %c0_i32_0 = arith.constant 0 : i32
    return %c0_i32 : i32
  }
  func.func @transform_1(%arg0: i32, %arg1: memref<1xi32, #tpu.memory_space<smem>>, %arg2: memref<1xi32, #tpu.memory_space<smem>>) -> i32 {
    %c0_i32 = arith.constant 0 : i32
    %c0_i32_0 = arith.constant 0 : i32
    return %c0_i32 : i32
  }
  func.func @transform_2(%arg0: i32, %arg1: memref<1xi32, #tpu.memory_space<smem>>, %arg2: memref<1xi32, #tpu.memory_space<smem>>) -> i32 {
    %c0_i32 = arith.constant 0 : i32
    %c0_i32_0 = arith.constant 0 : i32
    return %c0_i32 : i32
  }
  func.func @transform_3(%arg0: i32, %arg1: memref<1xi32, #tpu.memory_space<smem>>, %arg2: memref<1xi32, #tpu.memory_space<smem>>) -> i32 {
    %c0_i32 = arith.constant 0 : i32
    %c0_i32_0 = arith.constant 0 : i32
    return %c0_i32 : i32
  }
  func.func @transform_4(%arg0: i32, %arg1: memref<1xi32, #tpu.memory_space<smem>>, %arg2: memref<1xi32, #tpu.memory_space<smem>>) -> i32 {
    %c0_i32 = arith.constant 0 : i32
    %c0_i32_0 = arith.constant 0 : i32
    return %c0_i32 : i32
  }
  func.func @transform_5(%arg0: i32, %arg1: memref<1xi32, #tpu.memory_space<smem>>, %arg2: memref<1xi32, #tpu.memory_space<smem>>) -> (i32, i32) {
    %0 = arith.index_cast %arg0 : i32 to index
    %1 = memref.load %arg1[%0] : memref<1xi32, #tpu.memory_space<smem>>
    %c0_i32 = arith.constant 0 : i32
    %c0_i32_0 = arith.constant 0 : i32
    return %1, %c0_i32 : i32, i32
  }
  func.func @transform_6(%arg0: i32, %arg1: memref<1xi32, #tpu.memory_space<smem>>, %arg2: memref<1xi32, #tpu.memory_space<smem>>) -> (i32, i32) {
    %0 = arith.index_cast %arg0 : i32 to index
    %1 = memref.load %arg2[%0] : memref<1xi32, #tpu.memory_space<smem>>
    %c0_i32 = arith.constant 0 : i32
    %c0_i32_0 = arith.constant 0 : i32
    return %c0_i32, %1 : i32, i32
  }
  func.func @transform_7(%arg0: i32, %arg1: memref<1xi32, #tpu.memory_space<smem>>, %arg2: memref<1xi32, #tpu.memory_space<smem>>) -> (i32, i32) {
    %0 = arith.index_cast %arg0 : i32 to index
    %1 = memref.load %arg1[%0] : memref<1xi32, #tpu.memory_space<smem>>
    %2 = arith.index_cast %arg0 : i32 to index
    %3 = memref.load %arg2[%2] : memref<1xi32, #tpu.memory_space<smem>>
    %c0_i32 = arith.constant 0 : i32
    return %1, %3 : i32, i32
  }
}

</mosaic_0001>

<llo_original>
// kernel: nnp_forward.1
$region0: #{nnp_forward.1}
  #allocation0 [shape = 'u32[]', space=smem, size = 0x4, offset = 0x4, fixed_abs, tag = 'smem constant byte address 0x4 - core index']
  #allocation1 [shape = 'u32[144,128]{1,0:T(1,128)}', space=vmem, size = 0x12000, scoped, tag = 'internal scratch']
  #allocation2 [shape = 's32[1]{0}', space=sflag, size = 0x4, scoped, tag = 'scoped memory for nnp_forward.1']
  #allocation3 [shape = 's32[1]{0:T(128)S(6)}', space=smem, size = 0x200, scoped, tag = 'prefetched SMEM operand 0']
  #allocation4 [shape = 's32[1]{0:T(128)S(6)}', space=smem, size = 0x200, scoped, tag = 'prefetched SMEM operand 1']
  %s0 = inlined_call_operand.<no memory space> [shape: s32[1], index: 0, kind: input, shape index: {}, may-alias: {0,1}]
  %s1 = inlined_call_operand.<no memory space> [shape: s32[1], index: 1, kind: input, shape index: {}, may-alias: {0,1}]
  %s2 = inlined_call_operand.vmem [shape: f32[3], index: 2, kind: input, shape index: {}]
  %s3 = inlined_call_operand.vmem [shape: f32[3], index: 3, kind: input, shape index: {}]
  %s4 = inlined_call_operand.vmem [shape: f32[100], index: 4, kind: input, shape index: {}]
  %s5 = inlined_call_operand.vmem [shape: f32[100], index: 5, kind: input, shape index: {}]
  %s6 = inlined_call_operand.vmem [shape: f32[2], index: 6, kind: input, shape index: {}]
  %s7 = inlined_call_operand.vmem [shape: f32[128,3], index: 7, kind: input, shape index: {}]
  %s8 = inlined_call_operand.vmem [shape: f32[3,128], index: 8, kind: input, shape index: {}]
  %s9 = inlined_call_operand.vmem [shape: f32[128,128], index: 9, kind: output, shape index: {}]
  %s10 = sld [smem:[#allocation0]]
  $region72: #{nnp_forward.1} parent=0
    _
  %s12 = ssub.s32 1, %s10
  %s13 = scalar_select 0, %s12, %s10
  %14 = sst [smem:[#allocation3]] %s0
  %15 = sst [smem:[#allocation4]] %s1
  $region1: #{nnp_forward.1} parent=0
    #allocation5 [shape = 'u8[512]{0}', space=smem, size = 0x200, scoped, tag = 'input window, operand 2, single buffered']
    #allocation6 [shape = 's32[1]{0}', space=sflag, size = 0x4, scoped, tag = 'scoped memory for nnp_forward.1']
    #allocation7 [shape = 'u8[512]{0}', space=smem, size = 0x200, scoped, tag = 'input window, operand 3, single buffered']
    #allocation8 [shape = 's32[1]{0}', space=sflag, size = 0x4, scoped, tag = 'scoped memory for nnp_forward.1']
    #allocation9 [shape = 'u8[512]{0}', space=smem, size = 0x200, scoped, tag = 'input window, operand 4, single buffered']
    #allocation10 [shape = 'u8[512]{0}', space=smem, size = 0x200, scoped, tag = 'input window, operand 5, single buffered']
    #allocation11 [shape = 's32[1]{0}', space=sflag, size = 0x4, scoped, tag = 'scoped memory for nnp_forward.1']
    #allocation12 [shape = 'u8[512]{0}', space=smem, size = 0x200, scoped, tag = 'input window, operand 6, single buffered']
    %16 = vsyncpa [#allocation6], 0
    %17 = vsyncpa [#allocation8], 0
    %18 = vsyncpa [#allocation11], 0
    // Predicated region
    $region2: #{nnp_forward.1} parent=1 // pred_check
      _
    $region3: #{nnp_forward.1} parent=1 // pred_check_branch
      %20 = sbr.rel (0) target = $region5
    $region4: #{nnp_forward.1} parent=1 // pred_region
      %s22 = ssub.s32 16, 16
      %23 = vsyncadd [#allocation6], %s22
      %s25 = sshll.u32 %s2, 4
      %s26 = int_to_ptr.vmem [resolvable:$true] %s25
      %28 = dma.vmem_to_smem %s26, 16, [#allocation5], [#allocation6]
    $region5: #{nnp_forward.1} parent=1 // pred_fallthru
      _
    // Predicated region
    $region6: #{nnp_forward.1} parent=1 // pred_check
      _
    $region7: #{nnp_forward.1} parent=1 // pred_check_branch
      %30 = sbr.rel (0) target = $region9
    $region8: #{nnp_forward.1} parent=1 // pred_region
      %s32 = ssub.s32 16, 16
      %33 = vsyncadd [#allocation8], %s32
      %s35 = sshll.u32 %s3, 4
      %s36 = int_to_ptr.vmem [resolvable:$true] %s35
      %38 = dma.vmem_to_smem %s36, 16, [#allocation7], [#allocation8]
    $region9: #{nnp_forward.1} parent=1 // pred_fallthru
      _
    // Predicated region
    $region10: #{nnp_forward.1} parent=1 // pred_check
      _
    $region11: #{nnp_forward.1} parent=1 // pred_check_branch
      %40 = sbr.rel (0) target = $region13
    $region12: #{nnp_forward.1} parent=1 // pred_region
      %s42 = ssub.s32 16, 16
      %43 = vsyncadd [#allocation8], %s42
      %s45 = sshll.u32 %s4, 4
      %s46 = int_to_ptr.vmem [resolvable:$true] %s45
      %48 = dma.vmem_to_smem %s46, 16, [#allocation9], [#allocation8]
    $region13: #{nnp_forward.1} parent=1 // pred_fallthru
      _
    // Predicated region
    $region14: #{nnp_forward.1} parent=1 // pred_check
      _
    $region15: #{nnp_forward.1} parent=1 // pred_check_branch
      %50 = sbr.rel (0) target = $region17
    $region16: #{nnp_forward.1} parent=1 // pred_region
      %s52 = ssub.s32 16, 16
      %53 = vsyncadd [#allocation11], %s52
      %s55 = sshll.u32 %s5, 4
      %s56 = int_to_ptr.vmem [resolvable:$true] %s55
      %58 = dma.vmem_to_smem %s56, 16, [#allocation10], [#allocation11]
    $region17: #{nnp_forward.1} parent=1 // pred_fallthru
      _
    // Predicated region
    $region18: #{nnp_forward.1} parent=1 // pred_check
      _
    $region19: #{nnp_forward.1} parent=1 // pred_check_branch
      %60 = sbr.rel (0) target = $region21
    $region20: #{nnp_forward.1} parent=1 // pred_region
      %s62 = ssub.s32 16, 16
      %63 = vsyncadd [#allocation11], %s62
      %s65 = sshll.u32 %s6, 4
      %s66 = int_to_ptr.vmem [resolvable:$true] %s65
      %68 = dma.vmem_to_smem %s66, 16, [#allocation12], [#allocation11]
    $region21: #{nnp_forward.1} parent=1 // pred_fallthru
      _
    // Predicated region
    $region22: #{nnp_forward.1} parent=1 // pred_check
      _
    $region23: #{nnp_forward.1} parent=1 // pred_check_branch
      %70 = sbr.rel (0) target = $region25
    $region24: #{nnp_forward.1} parent=1 // pred_region
      %s71 = sld [smem:[#allocation3]]
      %s72 = smul.u32 16, %s71
      %p73 = scmp.lt.s32.totalorder %s72, 15
      %s74 = scalar_select %p73, %s72, 15
      %s75 = smul.addr %s74, 8
      %s76 = scalar_lea.vmem %s7, %s75
      %s77 = sld [smem:[#allocation3]]
      %s78 = smul.u32 16, %s77
    $region25: #{nnp_forward.1} parent=1 // pred_fallthru
      _
    // Predicated region
    $region26: #{nnp_forward.1} parent=1 // pred_check
      _
    $region27: #{nnp_forward.1} parent=1 // pred_check_branch
      %80 = sbr.rel (0) target = $region29
    $region28: #{nnp_forward.1} parent=1 // pred_region
      %s81 = sld [smem:[#allocation4]]
      %p82 = scmp.lt.s32.totalorder %s81, 0
      %s83 = scalar_select %p82, %s81, 0
      %s84 = smul.addr %s83, 4
      %s85 = scalar_lea.vmem %s8, %s84
      %s86 = sld [smem:[#allocation4]]
    $region29: #{nnp_forward.1} parent=1 // pred_fallthru
      _
    // Predicated region
    $region30: #{nnp_forward.1} parent=1 // pred_check
      _
    $region31: #{nnp_forward.1} parent=1 // pred_check_branch
      %88 = sbr.rel (0) target = $region33
    $region32: #{nnp_forward.1} parent=1 // pred_region
      %89 = dma.done [#allocation6], 16
    $region33: #{nnp_forward.1} parent=1 // pred_fallthru
      _
    // Predicated region
    $region34: #{nnp_forward.1} parent=1 // pred_check
      _
    $region35: #{nnp_forward.1} parent=1 // pred_check_branch
      %91 = sbr.rel (0) target = $region37
    $region36: #{nnp_forward.1} parent=1 // pred_region
      %92 = dma.done [#allocation8], 16
    $region37: #{nnp_forward.1} parent=1 // pred_fallthru
      _
    // Predicated region
    $region38: #{nnp_forward.1} parent=1 // pred_check
      _
    $region39: #{nnp_forward.1} parent=1 // pred_check_branch
      %94 = sbr.rel (0) target = $region41
    $region40: #{nnp_forward.1} parent=1 // pred_region
      %95 = dma.done [#allocation8], 16
    $region41: #{nnp_forward.1} parent=1 // pred_fallthru
      _
    // Predicated region
    $region42: #{nnp_forward.1} parent=1 // pred_check
      _
    $region43: #{nnp_forward.1} parent=1 // pred_check_branch
      %97 = sbr.rel (0) target = $region45
    $region44: #{nnp_forward.1} parent=1 // pred_region
      %98 = dma.done [#allocation11], 16
    $region45: #{nnp_forward.1} parent=1 // pred_fallthru
      _
    // Predicated region
    $region46: #{nnp_forward.1} parent=1 // pred_check
      _
    $region47: #{nnp_forward.1} parent=1 // pred_check_branch
      %100 = sbr.rel (0) target = $region49
    $region48: #{nnp_forward.1} parent=1 // pred_region
      %101 = dma.done [#allocation11], 16
    $region49: #{nnp_forward.1} parent=1 // pred_fallthru
      _
    %102 = sfence
    %s103 = sld [smem:[#allocation3]]
    %s104 = smul.u32 16, %s103
    %p105 = scmp.lt.s32.totalorder %s104, 15
    %s106 = scalar_select %p105, %s104, 15
    %s107 = smul.addr %s106, 8
    %s108 = scalar_lea.vmem %s7, %s107
    %s109 = sld [smem:[#allocation4]]
    %p110 = scmp.lt.s32.totalorder %s109, 0
    %s111 = scalar_select %p110, %s109, 0
    %s112 = smul.addr %s111, 4
    %s113 = scalar_lea.vmem %s8, %s112
    %s114 = sld [smem:[#allocation3]]
    %s115 = sld [smem:[#allocation4]]
    %s116 = smul.u32 16, %s114
    %p117 = scmp.lt.s32.totalorder %s116, 15
    %s118 = scalar_select %p117, %s116, 15
    %p119 = scmp.lt.s32.totalorder %s115, 0
    %s120 = scalar_select %p119, %s115, 0
    %s121 = sadd.s32 %s120, %s118
    %s122 = smul.addr %s121, 8
    %s123 = scalar_lea.vmem %s9, %s122
    %s124 = sld [smem:[#allocation3]]
    %s125 = smul.u32 16, %s124
    %p126 = scmp.lt.s32.totalorder %s125, 15
    %s127 = scalar_select %p126, %s125, 15
    %s128 = smul.addr %s127, 8
    %s129 = scalar_lea.vmem %s7, %s128
    %s130 = sld [smem:[#allocation3]]
    %s131 = smul.u32 16, %s130
    %s132 = sld [smem:[#allocation4]]
    %p133 = scmp.lt.s32.totalorder %s132, 0
    %s134 = scalar_select %p133, %s132, 0
    %s135 = smul.addr %s134, 4
    %s136 = scalar_lea.vmem %s8, %s135
    %s137 = sld [smem:[#allocation4]]
    %s138 = sld [smem:[#allocation3]]
    %s139 = sld [smem:[#allocation4]]
    %s140 = smul.u32 16, %s138
    %p141 = scmp.lt.s32.totalorder %s140, 15
    %s142 = scalar_select %p141, %s140, 15
    %p143 = scmp.lt.s32.totalorder %s139, 0
    %s144 = scalar_select %p143, %s139, 0
    %s145 = sadd.s32 %s144, %s142
    %s146 = smul.addr %s145, 8
    %s147 = scalar_lea.vmem %s9, %s146
    %s148 = sld [smem:[#allocation3]]
    %s149 = sld [smem:[#allocation4]]
    %s150 = smul.u32 16, %s148
    %s151 = sld [smem:[#allocation12]]
    %s152 = sld [smem:[#allocation12 + $0x1]]
    loop: start=0, step=1, limit=8
    $region50: #{nnp_forward.1} parent=1 // loop_pre_header
      _
    $region51: #{nnp_forward.1} parent=1 // loop_header
      %s154 = sphi 0, %s158
      %p155 = scmp.ge.s32.totalorder %s154, 8
    $region52: #{nnp_forward.1} parent=1 // loop_header_branch
      %157 = sbr.rel (%p155) target = $region56
    $region53: #{nnp_forward.1} parent=1 // loop_body
      %s159 = smul.u32 %s154, 16
      %s160 = scalar_lea.vmem %s129, %s159
      %v161 = vld [vmem:[%s160] sm:$0xff]
      %v162 = vld [vmem:[%s160 + $0x8] sm:$0xff]
      %v163 = vld [vmem:[%s136] sm:$0x1]
      %165 = vset.pattern.permute.xlu0 0
      %166 = vperm.xlu0 %165, %v161
      %v167 = vpop.permute.xlu0 %166
      %170 = vset.pattern.permute.xlu0 0
      %171 = vperm.xlu0 %170, %v162
      %v172 = vpop.permute.xlu0 %171
      %v174 = vlaneseq
      %v175 = vshrl.u32 %v174, 7
      %v176 = vsub.s32 0, %v175
      %v177 = vrot.slane %v163, %v176
      %v178 = vsub.f32 %v167, %v177
      %v179 = vsub.f32 %v172, %v177
      %s180 = sld [smem:[#allocation5]]
      %s181 = sld [smem:[#allocation7]]
      %v182 = vstv %s181
      %v183 = vmul.f32 %v178, %v182
      %v184 = vmul.f32 %v179, %v182
      %v185 = vadd.f32 %v183, 0.5
      %v186 = vadd.f32 %v184, 0.5
      %v187 = vfloor.f32 %v185
      %v188 = vfloor.f32 %v186
      %v189 = vstv %s180
      %v190 = vmul.f32 %v189, %v187
      %v191 = vmul.f32 %v189, %v188
      %v192 = vsub.f32 %v178, %v190
      %v193 = vsub.f32 %v179, %v191
      %v194 = vmul.f32 %v192, %v192
      %v195 = vmul.f32 %v193, %v193
      %v196 = vadd.f32 %v194, 0.0
      %v197 = vadd.f32 %v195, 0.0
      %v198 = vld [vmem:[%s136 + $0x1] sm:$0x1]
      %199 = vset.pattern.permute.xlu0 1
      %200 = vperm.xlu0 %199, %v161
      %v201 = vpop.permute.xlu0 %200
      %203 = vset.pattern.permute.xlu0 1
      %204 = vperm.xlu0 %203, %v162
      %v205 = vpop.permute.xlu0 %204
      %v207 = vlaneseq
      %v208 = vshrl.u32 %v207, 7
      %v209 = vsub.s32 0, %v208
      %v210 = vrot.slane %v198, %v209
      %v211 = vsub.f32 %v201, %v210
      %v212 = vsub.f32 %v205, %v210
      %s213 = sld [smem:[#allocation5 + $0x1]]
      %s214 = sld [smem:[#allocation7 + $0x1]]
      %v215 = vstv %s214
      %v216 = vmul.f32 %v211, %v215
      %v217 = vmul.f32 %v212, %v215
      %v218 = vadd.f32 %v216, 0.5
      %v219 = vadd.f32 %v217, 0.5
      %v220 = vfloor.f32 %v218
      %v221 = vfloor.f32 %v219
      %v222 = vstv %s213
      %v223 = vmul.f32 %v222, %v220
      %v224 = vmul.f32 %v222, %v221
      %v225 = vsub.f32 %v211, %v223
      %v226 = vsub.f32 %v212, %v224
      %v227 = vmul.f32 %v225, %v225
      %v228 = vmul.f32 %v226, %v226
      %v229 = vadd.f32 %v196, %v227
      %v230 = vadd.f32 %v197, %v228
      %v231 = vld [vmem:[%s136 + $0x2] sm:$0x1]
      %232 = vset.pattern.permute.xlu0 2
      %233 = vperm.xlu0 %232, %v161
      %v234 = vpop.permute.xlu0 %233
      %236 = vset.pattern.permute.xlu0 2
      %237 = vperm.xlu0 %236, %v162
      %v238 = vpop.permute.xlu0 %237
      %v240 = vlaneseq
      %v241 = vshrl.u32 %v240, 7
      %v242 = vsub.s32 0, %v241
      %v243 = vrot.slane %v231, %v242
      %v244 = vsub.f32 %v234, %v243
      %v245 = vsub.f32 %v238, %v243
      %s246 = sld [smem:[#allocation5 + $0x2]]
      %s247 = sld [smem:[#allocation7 + $0x2]]
      %v248 = vstv %s247
      %v249 = vmul.f32 %v244, %v248
      %v250 = vmul.f32 %v245, %v248
      %v251 = vadd.f32 %v249, 0.5
      %v252 = vadd.f32 %v250, 0.5
      %v253 = vfloor.f32 %v251
      %v254 = vfloor.f32 %v252
      %v255 = vstv %s246
      %v256 = vmul.f32 %v255, %v253
      %v257 = vmul.f32 %v255, %v254
      %v258 = vsub.f32 %v244, %v256
      %v259 = vsub.f32 %v245, %v257
      %v260 = vmul.f32 %v258, %v258
      %v261 = vmul.f32 %v259, %v259
      %v262 = vadd.f32 %v229, %v260
      %v263 = vadd.f32 %v230, %v261
      %vm264 = vcmp.gt.f32.partialorder %v262, 0.0
      %vm265 = vcmp.gt.f32.partialorder %v263, 0.0
      %v266 = vrsqrt.pop %v262
      %v267 = vmul.f32 %v262, %v266
      %vm268 = vcmp.eq.f32.partialorder %v262, inf
      %v269 = vsel %vm268, %v262, %v267
      %vm270 = vcmp.eq.f32.partialorder %v262, 0.0
      %v271 = vand.u32 %v262, 2147483648
      %v272 = vsel %vm270, %v271, %v269
      %v273 = vrsqrt.pop %v263
      %v274 = vmul.f32 %v263, %v273
      %vm275 = vcmp.eq.f32.partialorder %v263, inf
      %v276 = vsel %vm275, %v263, %v274
      %vm277 = vcmp.eq.f32.partialorder %v263, 0.0
      %v278 = vand.u32 %v263, 2147483648
      %v279 = vsel %vm277, %v278, %v276
      %v280 = vsel %vm264, %v272, 0.0
      %v281 = vsel %vm265, %v279, 0.0
      %v282 = vstv %s151
      %v283 = vmul.f32 %v282, %v280
      %v284 = vmul.f32 %v282, %v281
      %v285 = vstv %s152
      %v286 = vadd.f32 %v283, %v285
      %v287 = vadd.f32 %v284, %v285
      loop: start=0, step=1, limit=25
      $region57: #{nnp_forward.1} parent=53 // loop_pre_header
        _
      $region58: #{nnp_forward.1} parent=53 // loop_header
        %s289 = sphi 0, %s293
        %p290 = scmp.ge.s32.totalorder %s289, 25
        %v294 = vphi %v286, %v346
        %v295 = vphi %v287, %v347
      $region59: #{nnp_forward.1} parent=53 // loop_header_branch
        %292 = sbr.rel (%p290) target = $region63
      $region60: #{nnp_forward.1} parent=53 // loop_body
        %s296 = smul.u32 %s289, 4
        %s297 = sld [smem:[#allocation10 + %s296]]
        %s298 = sld [smem:[#allocation9 + %s296]]
        %v299 = vstv %s298
        %v300 = vadd.f32 %v280, %v299
        %v301 = vadd.f32 %v281, %v299
        %v302 = vand.u32 2147483647, %v300
        %v303 = vand.u32 2147483647, %v301
        %v304 = vstv %s297
        %v305 = vmul.f32 %v304, %v302
        %v306 = vmul.f32 %v304, %v303
        %v307 = vadd.f32 %v294, %v305
        %v308 = vadd.f32 %v295, %v306
        %s309 = sadd.s32 %s296, 1
        %s310 = sld [smem:[#allocation10 + %s309]]
        %s311 = sld [smem:[#allocation9 + %s309]]
        %v312 = vstv %s311
        %v313 = vadd.f32 %v280, %v312
        %v314 = vadd.f32 %v281, %v312
        %v315 = vand.u32 2147483647, %v313
        %v316 = vand.u32 2147483647, %v314
        %v317 = vstv %s310
        %v318 = vmul.f32 %v317, %v315
        %v319 = vmul.f32 %v317, %v316
        %v320 = vadd.f32 %v307, %v318
        %v321 = vadd.f32 %v308, %v319
        %s322 = sadd.s32 %s296, 2
        %s323 = sld [smem:[#allocation10 + %s322]]
        %s324 = sld [smem:[#allocation9 + %s322]]
        %v325 = vstv %s324
        %v326 = vadd.f32 %v280, %v325
        %v327 = vadd.f32 %v281, %v325
        %v328 = vand.u32 2147483647, %v326
        %v329 = vand.u32 2147483647, %v327
        %v330 = vstv %s323
        %v331 = vmul.f32 %v330, %v328
        %v332 = vmul.f32 %v330, %v329
        %v333 = vadd.f32 %v320, %v331
        %v334 = vadd.f32 %v321, %v332
        %s335 = sadd.s32 %s296, 3
        %s336 = sld [smem:[#allocation10 + %s335]]
        %s337 = sld [smem:[#allocation9 + %s335]]
        %v338 = vstv %s337
        %v339 = vadd.f32 %v280, %v338
        %v340 = vadd.f32 %v281, %v338
        %v341 = vand.u32 2147483647, %v339
        %v342 = vand.u32 2147483647, %v340
        %v343 = vstv %s336
        %v344 = vmul.f32 %v343, %v341
        %v345 = vmul.f32 %v343, %v342
        %v346 = vadd.f32 %v333, %v344
        %v347 = vadd.f32 %v334, %v345
      $region61: #{nnp_forward.1} parent=53 // loop_footer
        %s293 = sadd.s32 1, %s289
      $region62: #{nnp_forward.1} parent=53 // loop_footer_branch
        %288 = sbr.rel target = $region58
      $region63: #{nnp_forward.1} parent=53 // loop_exit
        _
      %s348 = scalar_lea.vmem %s147, %s159
      %349 = vst [vmem:[%s348] sm:$0xff] %v294
      %350 = vst [vmem:[%s348 + $0x8] sm:$0xff] %v295
    $region54: #{nnp_forward.1} parent=1 // loop_footer
      %s158 = sadd.s32 1, %s154
    $region55: #{nnp_forward.1} parent=1 // loop_footer_branch
      %153 = sbr.rel target = $region51
    $region56: #{nnp_forward.1} parent=1 // loop_exit
      _
    %s351 = sld [smem:[#allocation3]]
    %s352 = sld [smem:[#allocation4]]
    %s353 = smul.u32 16, %s351
    %p354 = scmp.lt.s32.totalorder %s353, 15
    %s355 = scalar_select %p354, %s353, 15
    %p356 = scmp.lt.s32.totalorder %s352, 0
    %s357 = scalar_select %p356, %s352, 0
    %s358 = sadd.s32 %s357, %s355
    %s359 = smul.addr %s358, 8
    %s360 = scalar_lea.vmem %s9, %s359
    // Predicated region
    $region64: #{nnp_forward.1} parent=1 // pred_check
      _
    $region65: #{nnp_forward.1} parent=1 // pred_check_branch
      %362 = sbr.rel (0) target = $region67
    $region66: #{nnp_forward.1} parent=1 // pred_region
      %s363 = sld [smem:[#allocation3]]
      %s364 = sld [smem:[#allocation4]]
      %s365 = smul.u32 16, %s363
    $region67: #{nnp_forward.1} parent=1 // pred_fallthru
      _
    // Predicated region
    $region68: #{nnp_forward.1} parent=1 // pred_check
      _
    $region69: #{nnp_forward.1} parent=1 // pred_check_branch
      %367 = sbr.rel (0) target = $region71
    $region70: #{nnp_forward.1} parent=1 // pred_region
      %s368 = sld [smem:[#allocation3]]
      %s369 = sld [smem:[#allocation4]]
      %s370 = smul.u32 16, %s368
      %p371 = scmp.lt.s32.totalorder %s370, 15
      %s372 = scalar_select %p371, %s370, 15
      %p373 = scmp.lt.s32.totalorder %s369, 0
      %s374 = scalar_select %p373, %s369, 0
      %s375 = sadd.s32 %s374, %s372
      %s376 = smul.addr %s375, 8
      %s377 = scalar_lea.vmem %s9, %s376
    $region71: #{nnp_forward.1} parent=1 // pred_fallthru
      _
    %378 = vsyncpa [#allocation6], 1
    %379 = vsyncpa [#allocation8], 1
    %380 = vsyncpa [#allocation11], 1

</llo_original>
